<compile_context>
chip_gen: v7x
topology: tpu7x:2x2x1
jax: 0.10.0
libtpu: 0.0.40
codegen_flags: <defaults>
</compile_context>

<pallas_src>
import functools

import jax
import jax.numpy as jnp
from jax.experimental import pallas as pl
from jax.experimental.pallas import tpu as pltpu

LANE = 128        # fast (last) axis width of a vreg
SUBLANE = 8       # slow (second-last) axis width of a vreg
MIN_ROWS_PER_CORE = 512   # split the grid across v7x TCs once batch >= 2*this


def _round_up(n, m):
    return ((n + m - 1) // m) * m


# --------------------------------------------------------------------------- #
# One-time parameter packing (do NOT call per forward step).
# --------------------------------------------------------------------------- #
def pack_params(params, matmul_dtype=jnp.bfloat16):
    """Pad hidden/output feature dims to 128 lanes and pre-cast weights to the
    MXU input dtype.  Layer-1 keeps its true K (= input_dim) because x streams
    unpadded.  Biases stay float32 (VPU bias-add / ReLU path)."""
    w1, b1, w2, b2, w3, b3 = params
    input_dim, hidden_dim = w1.shape
    output_dim = w3.shape[1]
    hid_p = _round_up(hidden_dim, LANE)
    out_p = _round_up(output_dim, LANE)

    w1p = jnp.zeros((input_dim, hid_p), matmul_dtype).at[:, :hidden_dim].set(
        w1.astype(matmul_dtype))
    b1p = jnp.zeros((1, hid_p), jnp.float32).at[:, :hidden_dim].set(
        b1.astype(jnp.float32))
    w2p = jnp.zeros((hid_p, hid_p), matmul_dtype).at[:hidden_dim, :hidden_dim].set(
        w2.astype(matmul_dtype))
    b2p = jnp.zeros((1, hid_p), jnp.float32).at[:, :hidden_dim].set(
        b2.astype(jnp.float32))
    w3p = jnp.zeros((hid_p, out_p), matmul_dtype).at[:hidden_dim, :output_dim].set(
        w3.astype(matmul_dtype))
    b3p = jnp.zeros((1, out_p), jnp.float32).at[:, :output_dim].set(
        b3.astype(jnp.float32))
    return (w1p, b1p, w2p, b2p, w3p, b3p)


# --------------------------------------------------------------------------- #
# Kernel: fused 3-layer MLP for one batch tile.
# --------------------------------------------------------------------------- #
def dqn_mlp_kernel(x_ref, w1_ref, b1_ref, w2_ref, b2_ref, w3_ref, b3_ref, o_ref):
    mxu_dtype = w1_ref.dtype          # weights are pre-cast; only cast activations

    # layer 1: Linear(input, hidden) + ReLU   (bf16/f32 MXU inputs, f32 accum)
    x = x_ref[...].astype(mxu_dtype)                       # (tb, input_dim), true K
    h1 = jnp.dot(x, w1_ref[...], preferred_element_type=jnp.float32)
    h1 = jnp.maximum(h1 + b1_ref[...], 0.0)                # f32 bias/ReLU (v5e-safe)

    # layer 2: Linear(hidden, hidden) + ReLU
    h2 = jnp.dot(h1.astype(mxu_dtype), w2_ref[...],
                 preferred_element_type=jnp.float32)
    h2 = jnp.maximum(h2 + b2_ref[...], 0.0)

    # layer 3: Linear(hidden, output), no activation
    out = jnp.dot(h2.astype(mxu_dtype), w3_ref[...],
                  preferred_element_type=jnp.float32)
    out = out + b3_ref[...]

    # o_ref is either (tb, out_p) lane-dense (unmasked vst) or (tb, output_dim).
    o_ref[...] = out[:, :o_ref.shape[-1]].astype(o_ref.dtype)


# --------------------------------------------------------------------------- #
# Wrapper.
# --------------------------------------------------------------------------- #
def dqn_forward(x, packed_params, output_dim, *, batch_tile=1024,
                lane_dense_output=None):
    """Fused DQN MLP forward on (batch, input_dim) input using pre-packed params."""
    w1p, b1p, w2p, b2p, w3p, b3p = packed_params
    batch, input_dim = x.shape
    assert w1p.shape[0] == input_dim, "packed params do not match input_dim"
    out_p = w3p.shape[1]

    # ---- batch tiling: cdiv-style so irregular batches pad by < 8 rows ------
    tb_max = max(SUBLANE, _round_up(batch_tile, SUBLANE))
    aligned = _round_up(batch, SUBLANE)
    grid_n = pl.cdiv(aligned, tb_max)
    if grid_n == 1 and aligned >= 2 * MIN_ROWS_PER_CORE:
        grid_n = 2                     # shard the parallel axis over both v7x TCs
    tb = _round_up(pl.cdiv(aligned, grid_n), SUBLANE)
    batch_p = tb * grid_n

    # ---- output layout: lane-dense for tiny batches, unpadded for large -----
    if lane_dense_output is None:
        lane_dense_output = batch_p <= 1024
    n_out = out_p if lane_dense_output else output_dim

    # x feature axis stays unpadded; only pad dead batch rows when needed.
    xp = x if batch_p == batch else (
        jnp.zeros((batch_p, input_dim), x.dtype).at[:batch].set(x))

    # Weights / biases: constant block index every grid step -> VMEM-resident.
    def resident(shape):
        return pl.BlockSpec(shape, lambda i: (0,) * len(shape))

    out_padded = pl.pallas_call(
        dqn_mlp_kernel,
        out_shape=jax.ShapeDtypeStruct((batch_p, n_out), jnp.float32),
        grid=(grid_n,),
        in_specs=[
            pl.BlockSpec((tb, input_dim), lambda i: (i, 0)),   # x streams over batch
            resident(w1p.shape), resident(b1p.shape),
            resident(w2p.shape), resident(b2p.shape),
            resident(w3p.shape), resident(b3p.shape),
        ],
        out_specs=pl.BlockSpec((tb, n_out), lambda i: (i, 0)),
        compiler_params=pltpu.CompilerParams(
            dimension_semantics=("parallel",),
        ),
    )(xp, w1p, b1p, w2p, b2p, w3p, b3p)

    return out_padded[:batch, :output_dim]


# --------------------------------------------------------------------------- #
# Init + reference.
# --------------------------------------------------------------------------- #
def init_params(key, input_dim, output_dim, hidden_dim=64):
    """PyTorch nn.Linear-style init: U(-1/sqrt(fan_in), 1/sqrt(fan_in)).
    Weights stored pre-transposed as (in_features, out_features)."""
    dims = [(input_dim, hidden_dim), (hidden_dim, hidden_dim), (hidden_dim, output_dim)]
    params = []
    for fan_in, fan_out in dims:
        key, kw, kb = jax.random.split(key, 3)
        bound = 1.0 / jnp.sqrt(jnp.float32(fan_in))
        w = jax.random.uniform(kw, (fan_in, fan_out), jnp.float32, -bound, bound)
        b = jax.random.uniform(kb, (1, fan_out), jnp.float32, -bound, bound)
        params.extend([w, b])
    return tuple(params)


def reference_forward(x, params):
    """Plain-JAX reference for correctness check."""
    w1, b1, w2, b2, w3, b3 = params
    h1 = jnp.maximum(x @ w1 + b1, 0.0)
    h2 = jnp.maximum(h1 @ w2 + b2, 0.0)
    return h2 @ w3 + b3


if __name__ == "__main__":
    key = jax.random.PRNGKey(0)
    batch, input_dim, hidden_dim, output_dim = 2, 8, 64, 4

    key, kx = jax.random.split(key)
    x = jax.random.normal(kx, (batch, input_dim), jnp.float32)
    params = init_params(key, input_dim, output_dim, hidden_dim)

    # Pack once; jit the forward with the packed weights captured as constants
    # (so the RL loop never re-stages / re-pads weights per environment step).
    packed_f32 = pack_params(params, matmul_dtype=jnp.float32)
    packed_bf16 = pack_params(params, matmul_dtype=jnp.bfloat16)
    fwd_f32 = jax.jit(lambda xin: dqn_forward(xin, packed_f32, output_dim))
    fwd_bf16 = jax.jit(lambda xin: dqn_forward(xin, packed_bf16, output_dim))

    ref = reference_forward(x, params)

    # Exact-path check (f32 MXU inputs): tight tolerance.
    out_f32 = jax.block_until_ready(fwd_f32(x))
    assert out_f32.shape == (batch, output_dim)
    assert jnp.allclose(out_f32, ref, atol=1e-5, rtol=1e-5), "f32 path mismatch"

    # Fast-path check (bf16 MXU inputs, f32 accumulation): quantized inputs,
    # so compare with a loose tolerance.
    out_bf16 = jax.block_until_ready(fwd_bf16(x))
    assert out_bf16.shape == (batch, output_dim)
    assert jnp.allclose(out_bf16, ref, atol=5e-2, rtol=5e-2), "bf16 path mismatch"

    # TODO(synk): for a full RL step, fuse the argmax over Q-values into the
    # kernel epilogue to avoid a second tiny HBM round trip per env step.
    print("KERNEL_OK")
</pallas_src>

<mosaic_0001>
module attributes {stable_mosaic.version = 11 : i64} {
  func.func @dqn_mlp_kernel(%arg0: i32, %arg1: memref<8x8xf32, #tpu.memory_space<vmem>>, %arg2: memref<8x128xf32, #tpu.memory_space<vmem>>, %arg3: memref<1x128xf32, #tpu.memory_space<vmem>>, %arg4: memref<128x128xf32, #tpu.memory_space<vmem>>, %arg5: memref<1x128xf32, #tpu.memory_space<vmem>>, %arg6: memref<128x128xf32, #tpu.memory_space<vmem>>, %arg7: memref<1x128xf32, #tpu.memory_space<vmem>>, %arg8: memref<8x128xf32, #tpu.memory_space<vmem>>) attributes {dimension_semantics = [#tpu.dimension_semantics<parallel>], iteration_bounds = array<i64: 1>, scalar_prefetch = 0 : i64, scratch_operands = 0 : i64, tpu.core_type = #tpu.core_type<tc>, window_params = [{transform_indices = @transform_0, window_bounds = array<i64: 8, 8>}, {pipeline_mode = #tpu.pipeline_mode<synchronous>, transform_indices = @transform_1, window_bounds = array<i64: 8, 128>}, {pipeline_mode = #tpu.pipeline_mode<synchronous>, transform_indices = @transform_2, window_bounds = array<i64: 1, 128>}, {pipeline_mode = #tpu.pipeline_mode<synchronous>, transform_indices = @transform_3, window_bounds = array<i64: 128, 128>}, {pipeline_mode = #tpu.pipeline_mode<synchronous>, transform_indices = @transform_4, window_bounds = array<i64: 1, 128>}, {pipeline_mode = #tpu.pipeline_mode<synchronous>, transform_indices = @transform_5, window_bounds = array<i64: 128, 128>}, {pipeline_mode = #tpu.pipeline_mode<synchronous>, transform_indices = @transform_6, window_bounds = array<i64: 1, 128>}, {transform_indices = @transform_7, window_bounds = array<i64: 8, 128>}]} {
    %c0 = arith.constant 0 : index
    %c0_0 = arith.constant 0 : index
    %0 = vector.load %arg1[%c0, %c0_0] : memref<8x8xf32, #tpu.memory_space<vmem>>, vector<8x8xf32>
    %c0_1 = arith.constant 0 : index
    %c0_2 = arith.constant 0 : index
    %1 = vector.load %arg2[%c0_1, %c0_2] : memref<8x128xf32, #tpu.memory_space<vmem>>, vector<8x128xf32>
    %cst = arith.constant dense<0.000000e+00> : vector<8x128xf32>
    %2 = tpu.matmul %0, %1, %cst {dimension_numbers = #tpu.dot_dimension_numbers<[1], [0], [0], [1], [0, 0, 1, 1], [], []>} : vector<8x8xf32>, vector<8x128xf32>, vector<8x128xf32> -> vector<8x128xf32>
    %c0_3 = arith.constant 0 : index
    %c0_4 = arith.constant 0 : index
    %3 = vector.load %arg3[%c0_3, %c0_4] : memref<1x128xf32, #tpu.memory_space<vmem>>, vector<1x128xf32>
    %4 = vector.broadcast %3 : vector<1x128xf32> to vector<8x128xf32>
    %5 = arith.addf %2, %4 : vector<8x128xf32>
    %cst_5 = arith.constant 0.000000e+00 : f32
    %6 = vector.broadcast %cst_5 : f32 to vector<8x128xf32>
    %7 = arith.maximumf %5, %6 : vector<8x128xf32>
    %c0_6 = arith.constant 0 : index
    %c0_7 = arith.constant 0 : index
    %8 = vector.load %arg4[%c0_6, %c0_7] : memref<128x128xf32, #tpu.memory_space<vmem>>, vector<128x128xf32>
    %cst_8 = arith.constant dense<0.000000e+00> : vector<8x128xf32>
    %9 = tpu.matmul %7, %8, %cst_8 {dimension_numbers = #tpu.dot_dimension_numbers<[1], [0], [0], [1], [0, 0, 1, 1], [], []>} : vector<8x128xf32>, vector<128x128xf32>, vector<8x128xf32> -> vector<8x128xf32>
    %c0_9 = arith.constant 0 : index
    %c0_10 = arith.constant 0 : index
    %10 = vector.load %arg5[%c0_9, %c0_10] : memref<1x128xf32, #tpu.memory_space<vmem>>, vector<1x128xf32>
    %11 = vector.broadcast %10 : vector<1x128xf32> to vector<8x128xf32>
    %12 = arith.addf %9, %11 : vector<8x128xf32>
    %cst_11 = arith.constant 0.000000e+00 : f32
    %13 = vector.broadcast %cst_11 : f32 to vector<8x128xf32>
    %14 = arith.maximumf %12, %13 : vector<8x128xf32>
    %c0_12 = arith.constant 0 : index
    %c0_13 = arith.constant 0 : index
    %15 = vector.load %arg6[%c0_12, %c0_13] : memref<128x128xf32, #tpu.memory_space<vmem>>, vector<128x128xf32>
    %cst_14 = arith.constant dense<0.000000e+00> : vector<8x128xf32>
    %16 = tpu.matmul %14, %15, %cst_14 {dimension_numbers = #tpu.dot_dimension_numbers<[1], [0], [0], [1], [0, 0, 1, 1], [], []>} : vector<8x128xf32>, vector<128x128xf32>, vector<8x128xf32> -> vector<8x128xf32>
    %c0_15 = arith.constant 0 : index
    %c0_16 = arith.constant 0 : index
    %17 = vector.load %arg7[%c0_15, %c0_16] : memref<1x128xf32, #tpu.memory_space<vmem>>, vector<1x128xf32>
    %18 = vector.broadcast %17 : vector<1x128xf32> to vector<8x128xf32>
    %19 = arith.addf %16, %18 : vector<8x128xf32>
    %c0_17 = arith.constant 0 : index
    %c0_18 = arith.constant 0 : index
    %20 = vector.load %arg8[%c0_17, %c0_18] : memref<8x128xf32, #tpu.memory_space<vmem>>, vector<8x128xf32>
    tpu.vector_store %arg8[%c0_17, %c0_18], %19 {strides = array<i32>} : memref<8x128xf32, #tpu.memory_space<vmem>>, vector<8x128xf32>,
    return
  }
  func.func @transform_0(%arg0: i32) -> (i32, i32) {
    %c0_i32 = arith.constant 0 : i32
    %c0_i32_0 = arith.constant 0 : i32
    return %arg0, %c0_i32 : i32, i32
  }
  func.func @transform_1(%arg0: i32) -> (i32, i32) {
    %c0_i32 = arith.constant 0 : i32
    %c0_i32_0 = arith.constant 0 : i32
    %c0_i32_1 = arith.constant 0 : i32
    return %c0_i32, %c0_i32_0 : i32, i32
  }
  func.func @transform_2(%arg0: i32) -> (i32, i32) {
    %c0_i32 = arith.constant 0 : i32
    %c0_i32_0 = arith.constant 0 : i32
    %c0_i32_1 = arith.constant 0 : i32
    return %c0_i32, %c0_i32_0 : i32, i32
  }
  func.func @transform_3(%arg0: i32) -> (i32, i32) {
    %c0_i32 = arith.constant 0 : i32
    %c0_i32_0 = arith.constant 0 : i32
    %c0_i32_1 = arith.constant 0 : i32
    return %c0_i32, %c0_i32_0 : i32, i32
  }
  func.func @transform_4(%arg0: i32) -> (i32, i32) {
    %c0_i32 = arith.constant 0 : i32
    %c0_i32_0 = arith.constant 0 : i32
    %c0_i32_1 = arith.constant 0 : i32
    return %c0_i32, %c0_i32_0 : i32, i32
  }
  func.func @transform_5(%arg0: i32) -> (i32, i32) {
    %c0_i32 = arith.constant 0 : i32
    %c0_i32_0 = arith.constant 0 : i32
    %c0_i32_1 = arith.constant 0 : i32
    return %c0_i32, %c0_i32_0 : i32, i32
  }
  func.func @transform_6(%arg0: i32) -> (i32, i32) {
    %c0_i32 = arith.constant 0 : i32
    %c0_i32_0 = arith.constant 0 : i32
    %c0_i32_1 = arith.constant 0 : i32
    return %c0_i32, %c0_i32_0 : i32, i32
  }
  func.func @transform_7(%arg0: i32) -> (i32, i32) {
    %c0_i32 = arith.constant 0 : i32
    %c0_i32_0 = arith.constant 0 : i32
    return %arg0, %c0_i32 : i32, i32
  }
}

</mosaic_0001>

<llo_original>
// kernel: _lambda_.1
$region0: #{_lambda_.1}
  #allocation0 [shape = 'u32[]', space=smem, size = 0x4, offset = 0x4, fixed_abs, tag = 'smem constant byte address 0x4 - core index']
  #allocation1 [shape = 'u32[144,128]{1,0:T(1,128)}', space=vmem, size = 0x12000, scoped, tag = 'internal scratch']
  %s0 = inlined_call_operand.vmem [shape: f32[8,8], index: 0, kind: input, shape index: {}]
  %s1 = inlined_call_operand.vmem [shape: f32[8,128], index: 1, kind: input, shape index: {}]
  %s2 = inlined_call_operand.vmem [shape: f32[1,128], index: 2, kind: input, shape index: {}]
  %s3 = inlined_call_operand.hbm [shape: f32[128,128], index: 3, kind: input, shape index: {}]
  %s4 = inlined_call_operand.vmem [shape: f32[1,128], index: 4, kind: input, shape index: {}]
  %s5 = inlined_call_operand.hbm [shape: f32[128,128], index: 5, kind: input, shape index: {}]
  %s6 = inlined_call_operand.vmem [shape: f32[1,128], index: 6, kind: input, shape index: {}]
  %s7 = inlined_call_operand.vmem [shape: f32[8,128], index: 7, kind: output, shape index: {}]
  %s8 = sld [smem:[#allocation0]]
  $region46: #{_lambda_.1} parent=0
    _
  %s10 = ssub.s32 1, %s8
  %s11 = scalar_select 0, %s10, %s8
  $region1: #{_lambda_.1} parent=0
    #allocation2 [shape = 'u8[65536]{0}', space=vmem, size = 0x10000, scoped, tag = 'input window, operand 3, single buffered']
    #allocation3 [shape = 's32[1]{0}', space=sflag, size = 0x4, scoped, tag = 'scoped memory for _lambda_.1']
    #allocation4 [shape = 'u8[65536]{0}', space=vmem, size = 0x10000, scoped, tag = 'input window, operand 5, single buffered']
    #allocation5 [shape = 's32[1]{0}', space=sflag, size = 0x4, scoped, tag = 'scoped memory for _lambda_.1']
    %12 = vsyncpa [#allocation3], 0
    %13 = vsyncpa [#allocation5], 0
    // Predicated region
    $region2: #{_lambda_.1} parent=1 // pred_check
      _
    $region3: #{_lambda_.1} parent=1 // pred_check_branch
      %15 = sbr.rel (0) target = $region5
    $region4: #{_lambda_.1} parent=1 // pred_region
      _
    $region5: #{_lambda_.1} parent=1 // pred_fallthru
      _
    // Predicated region
    $region6: #{_lambda_.1} parent=1 // pred_check
      _
    $region7: #{_lambda_.1} parent=1 // pred_check_branch
      %17 = sbr.rel (0) target = $region9
    $region8: #{_lambda_.1} parent=1 // pred_region
      _
    $region9: #{_lambda_.1} parent=1 // pred_fallthru
      _
    // Predicated region
    $region10: #{_lambda_.1} parent=1 // pred_check
      _
    $region11: #{_lambda_.1} parent=1 // pred_check_branch
      %19 = sbr.rel (0) target = $region13
    $region12: #{_lambda_.1} parent=1 // pred_region
      _
    $region13: #{_lambda_.1} parent=1 // pred_fallthru
      _
    // Predicated region
    $region14: #{_lambda_.1} parent=1 // pred_check
      _
    $region15: #{_lambda_.1} parent=1 // pred_check_branch
      %21 = sbr.rel (0) target = $region17
    $region16: #{_lambda_.1} parent=1 // pred_region
      %s23 = ssub.s32 2048, 2048
      %24 = vsyncadd [#allocation3], %s23
      %s25 = sshll.u32 [#allocation2], 4
      %s26 = int_to_ptr.vmem [resolvable:$true] %s25
      %31 = dma.hbm_to_vmem [thread:$0]  %s3, 2048, %s26, [#allocation3], 128, 128, 8
    $region17: #{_lambda_.1} parent=1 // pred_fallthru
      _
    // Predicated region
    $region18: #{_lambda_.1} parent=1 // pred_check
      _
    $region19: #{_lambda_.1} parent=1 // pred_check_branch
      %33 = sbr.rel (0) target = $region21
    $region20: #{_lambda_.1} parent=1 // pred_region
      _
    $region21: #{_lambda_.1} parent=1 // pred_fallthru
      _
    // Predicated region
    $region22: #{_lambda_.1} parent=1 // pred_check
      _
    $region23: #{_lambda_.1} parent=1 // pred_check_branch
      %35 = sbr.rel (0) target = $region25
    $region24: #{_lambda_.1} parent=1 // pred_region
      %s37 = ssub.s32 2048, 2048
      %38 = vsyncadd [#allocation5], %s37
      %s39 = sshll.u32 [#allocation4], 4
      %s40 = int_to_ptr.vmem [resolvable:$true] %s39
      %45 = dma.hbm_to_vmem [thread:$0]  %s5, 2048, %s40, [#allocation5], 128, 128, 8
    $region25: #{_lambda_.1} parent=1 // pred_fallthru
      _
    // Predicated region
    $region26: #{_lambda_.1} parent=1 // pred_check
      _
    $region27: #{_lambda_.1} parent=1 // pred_check_branch
      %47 = sbr.rel (0) target = $region29
    $region28: #{_lambda_.1} parent=1 // pred_region
      _
    $region29: #{_lambda_.1} parent=1 // pred_fallthru
      _
    // Predicated region
    $region30: #{_lambda_.1} parent=1 // pred_check
      _
    $region31: #{_lambda_.1} parent=1 // pred_check_branch
      %49 = sbr.rel (0) target = $region33
    $region32: #{_lambda_.1} parent=1 // pred_region
      %50 = dma.done [#allocation3], 2048
    $region33: #{_lambda_.1} parent=1 // pred_fallthru
      _
    // Predicated region
    $region34: #{_lambda_.1} parent=1 // pred_check
      _
    $region35: #{_lambda_.1} parent=1 // pred_check_branch
      %52 = sbr.rel (0) target = $region37
    $region36: #{_lambda_.1} parent=1 // pred_region
      %53 = dma.done [#allocation5], 2048
    $region37: #{_lambda_.1} parent=1 // pred_fallthru
      _
    %v54 = vld [vmem:[%s0] sm:$0xff]
    %v55 = vld [vmem:[%s1] sm:$0xff]
    %v56 = vld [vmem:[%s2] sm:$0x1]
    %v58 = vlaneseq
    %v59 = vshrl.u32 %v58, 7
    %v60 = vsub.s32 0, %v59
    %v61 = vrot.slane %v56, %v60
    %vm63 = vcmask 64512
    %v65 = vsel %vm63, %v54, 0
    %67 = vmatprep.subr.mxu0 0.0
    %68 = vmatpush1.msra.mxu0 %v55
    %69 = vmatprep.subr.mxu0 0.0
    %70 = vmatpush1.msra.mxu0 0.0
    %71 = vmatprep.subr.mxu0 0.0
    %72 = vmatpush1.msra.mxu0 0.0
    %73 = vmatprep.subr.mxu0 0.0
    %74 = vmatpush1.msra.mxu0 0.0
    %75 = vmatprep.subr.mxu0 0.0
    %76 = vmatpush1.msra.mxu0 0.0
    %77 = vmatprep.subr.mxu0 0.0
    %78 = vmatpush1.msra.mxu0 0.0
    %79 = vmatprep.subr.mxu0 0.0
    %80 = vmatpush1.msra.mxu0 0.0
    %81 = vmatprep.subr.mxu0 0.0
    %82 = vmatpush1.msra.mxu0 0.0
    %83 = vmatprep.subr.mxu0 0.0
    %84 = vmatpush1.msra.mxu0 0.0
    %85 = vmatprep.subr.mxu0 0.0
    %86 = vmatpush1.msra.mxu0 0.0
    %87 = vmatprep.subr.mxu0 0.0
    %88 = vmatpush1.msra.mxu0 0.0
    %89 = vmatprep.subr.mxu0 0.0
    %90 = vmatpush1.msra.mxu0 0.0
    %91 = vmatprep.subr.mxu0 0.0
    %92 = vmatpush1.msra.mxu0 0.0
    %93 = vmatprep.subr.mxu0 0.0
    %94 = vmatpush1.msra.mxu0 0.0
    %95 = vmatprep.subr.mxu0 0.0
    %96 = vmatpush1.msra.mxu0 0.0
    %97 = vmatprep.subr.mxu0 0.0
    %98 = vmatpush1.msra.mxu0 0.0
    %99 = vmatprep.subr.mxu0 0.0
    %100 = vmatpush1.msra.mxu0 0.0
    %101 = vmatprep.subr.mxu0 0.0
    %102 = vmatpush1.msra.mxu0 0.0
    %103 = vmatprep.subr.mxu0 0.0
    %104 = vmatpush1.msra.mxu0 0.0
    %105 = vmatprep.subr.mxu0 0.0
    %106 = vmatpush1.msra.mxu0 0.0
    %107 = vmatprep.subr.mxu0 0.0
    %108 = vmatpush1.msra.mxu0 0.0
    %109 = vmatprep.subr.mxu0 0.0
    %110 = vmatpush1.msra.mxu0 0.0
    %111 = vmatprep.subr.mxu0 0.0
    %112 = vmatpush1.msra.mxu0 0.0
    %113 = vmatprep.subr.mxu0 0.0
    %114 = vmatpush1.msra.mxu0 0.0
    %115 = vmatprep.subr.mxu0 0.0
    %116 = vmatpush1.msra.mxu0 0.0
    %117 = vmatprep.subr.mxu0 0.0
    %118 = vmatpush1.msra.mxu0 0.0
    %119 = vmatprep.subr.mxu0 0.0
    %120 = vmatpush1.msra.mxu0 0.0
    %121 = vmatprep.subr.mxu0 0.0
    %122 = vmatpush1.msra.mxu0 0.0
    %123 = vmatprep.subr.mxu0 0.0
    %124 = vmatpush1.msra.mxu0 0.0
    %125 = vmatprep.subr.mxu0 0.0
    %126 = vmatpush1.msra.mxu0 0.0
    %127 = vmatprep.subr.mxu0 0.0
    %128 = vmatpush1.msra.mxu0 0.0
    %129 = vmatprep.subr.mxu0 0.0
    %130 = vmatpush1.msra.mxu0 0.0
    %131 = vmatprep.mubr.f32.mxu0 0.0
    %132 = vmatmul.mubr.f32.gmra.mrb[0].mxu0 %v65
    %v133 = vpop.f32.mrb[0].mxu0
    %v134 = vadd.f32 %v61, %v133
    %v135 = vpop.f32.mrb[0].mxu0
    %136 = vdwg.mxu0
    %v137 = vmax.f32 %v134, 0.0
    %v138 = vld [vmem:[#allocation2] sm:$0xff]
    %v139 = vld [vmem:[#allocation2 + $0x8] sm:$0xff]
    %v140 = vld [vmem:[#allocation2 + $0x10] sm:$0xff]
    %v141 = vld [vmem:[#allocation2 + $0x18] sm:$0xff]
    %v142 = vld [vmem:[#allocation2 + $0x20] sm:$0xff]
    %v143 = vld [vmem:[#allocation2 + $0x28] sm:$0xff]
    %v144 = vld [vmem:[#allocation2 + $0x30] sm:$0xff]
    %v145 = vld [vmem:[#allocation2 + $0x38] sm:$0xff]
    %v146 = vld [vmem:[#allocation2 + $0x40] sm:$0xff]
    %v147 = vld [vmem:[#allocation2 + $0x48] sm:$0xff]
    %v148 = vld [vmem:[#allocation2 + $0x50] sm:$0xff]
    %v149 = vld [vmem:[#allocation2 + $0x58] sm:$0xff]
    %v150 = vld [vmem:[#allocation2 + $0x60] sm:$0xff]
    %v151 = vld [vmem:[#allocation2 + $0x68] sm:$0xff]
    %v152 = vld [vmem:[#allocation2 + $0x70] sm:$0xff]
    %v153 = vld [vmem:[#allocation2 + $0x78] sm:$0xff]
    %v154 = vld [vmem:[%s4] sm:$0x1]
    %v156 = vlaneseq
    %v157 = vshrl.u32 %v156, 7
    %v158 = vsub.s32 0, %v157
    %v159 = vrot.slane %v154, %v158
    %161 = vmatprep.subr.mxu0 0.0
    %162 = vmatpush1.msra.mxu0 %v138
    %163 = vmatprep.subr.mxu0 0.0
    %164 = vmatpush1.msra.mxu0 %v139
    %165 = vmatprep.subr.mxu0 0.0
    %166 = vmatpush1.msra.mxu0 %v140
    %167 = vmatprep.subr.mxu0 0.0
    %168 = vmatpush1.msra.mxu0 %v141
    %169 = vmatprep.subr.mxu0 0.0
    %170 = vmatpush1.msra.mxu0 %v142
    %171 = vmatprep.subr.mxu0 0.0
    %172 = vmatpush1.msra.mxu0 %v143
    %173 = vmatprep.subr.mxu0 0.0
    %174 = vmatpush1.msra.mxu0 %v144
    %175 = vmatprep.subr.mxu0 0.0
    %176 = vmatpush1.msra.mxu0 %v145
    %177 = vmatprep.subr.mxu0 0.0
    %178 = vmatpush1.msra.mxu0 %v146
    %179 = vmatprep.subr.mxu0 0.0
    %180 = vmatpush1.msra.mxu0 %v147
    %181 = vmatprep.subr.mxu0 0.0
    %182 = vmatpush1.msra.mxu0 %v148
    %183 = vmatprep.subr.mxu0 0.0
    %184 = vmatpush1.msra.mxu0 %v149
    %185 = vmatprep.subr.mxu0 0.0
    %186 = vmatpush1.msra.mxu0 %v150
    %187 = vmatprep.subr.mxu0 0.0
    %188 = vmatpush1.msra.mxu0 %v151
    %189 = vmatprep.subr.mxu0 0.0
    %190 = vmatpush1.msra.mxu0 %v152
    %191 = vmatprep.subr.mxu0 0.0
    %192 = vmatpush1.msra.mxu0 %v153
    %193 = vmatprep.subr.mxu0 0.0
    %194 = vmatpush1.msra.mxu0 0.0
    %195 = vmatprep.subr.mxu0 0.0
    %196 = vmatpush1.msra.mxu0 0.0
    %197 = vmatprep.subr.mxu0 0.0
    %198 = vmatpush1.msra.mxu0 0.0
    %199 = vmatprep.subr.mxu0 0.0
    %200 = vmatpush1.msra.mxu0 0.0
    %201 = vmatprep.subr.mxu0 0.0
    %202 = vmatpush1.msra.mxu0 0.0
    %203 = vmatprep.subr.mxu0 0.0
    %204 = vmatpush1.msra.mxu0 0.0
    %205 = vmatprep.subr.mxu0 0.0
    %206 = vmatpush1.msra.mxu0 0.0
    %207 = vmatprep.subr.mxu0 0.0
    %208 = vmatpush1.msra.mxu0 0.0
    %209 = vmatprep.subr.mxu0 0.0
    %210 = vmatpush1.msra.mxu0 0.0
    %211 = vmatprep.subr.mxu0 0.0
    %212 = vmatpush1.msra.mxu0 0.0
    %213 = vmatprep.subr.mxu0 0.0
    %214 = vmatpush1.msra.mxu0 0.0
    %215 = vmatprep.subr.mxu0 0.0
    %216 = vmatpush1.msra.mxu0 0.0
    %217 = vmatprep.subr.mxu0 0.0
    %218 = vmatpush1.msra.mxu0 0.0
    %219 = vmatprep.subr.mxu0 0.0
    %220 = vmatpush1.msra.mxu0 0.0
    %221 = vmatprep.subr.mxu0 0.0
    %222 = vmatpush1.msra.mxu0 0.0
    %223 = vmatprep.subr.mxu0 0.0
    %224 = vmatpush1.msra.mxu0 0.0
    %225 = vmatprep.mubr.f32.mxu0 0.0
    %226 = vmatmul.mubr.f32.gmra.mrb[0].mxu0 %v137
    %v227 = vpop.f32.mrb[0].mxu0
    %v228 = vadd.f32 %v159, %v227
    %v229 = vpop.f32.mrb[0].mxu0
    %230 = vdwg.mxu0
    %v231 = vmax.f32 %v228, 0.0
    %v232 = vld [vmem:[#allocation4] sm:$0xff]
    %v233 = vld [vmem:[#allocation4 + $0x8] sm:$0xff]
    %v234 = vld [vmem:[#allocation4 + $0x10] sm:$0xff]
    %v235 = vld [vmem:[#allocation4 + $0x18] sm:$0xff]
    %v236 = vld [vmem:[#allocation4 + $0x20] sm:$0xff]
    %v237 = vld [vmem:[#allocation4 + $0x28] sm:$0xff]
    %v238 = vld [vmem:[#allocation4 + $0x30] sm:$0xff]
    %v239 = vld [vmem:[#allocation4 + $0x38] sm:$0xff]
    %v240 = vld [vmem:[#allocation4 + $0x40] sm:$0xff]
    %v241 = vld [vmem:[#allocation4 + $0x48] sm:$0xff]
    %v242 = vld [vmem:[#allocation4 + $0x50] sm:$0xff]
    %v243 = vld [vmem:[#allocation4 + $0x58] sm:$0xff]
    %v244 = vld [vmem:[#allocation4 + $0x60] sm:$0xff]
    %v245 = vld [vmem:[#allocation4 + $0x68] sm:$0xff]
    %v246 = vld [vmem:[#allocation4 + $0x70] sm:$0xff]
    %v247 = vld [vmem:[#allocation4 + $0x78] sm:$0xff]
    %v248 = vld [vmem:[%s6] sm:$0x1]
    %v250 = vlaneseq
    %v251 = vshrl.u32 %v250, 7
    %v252 = vsub.s32 0, %v251
    %v253 = vrot.slane %v248, %v252
    %255 = vmatprep.subr.mxu0 0.0
    %256 = vmatpush1.msra.mxu0 %v232
    %257 = vmatprep.subr.mxu0 0.0
    %258 = vmatpush1.msra.mxu0 %v233
    %259 = vmatprep.subr.mxu0 0.0
    %260 = vmatpush1.msra.mxu0 %v234
    %261 = vmatprep.subr.mxu0 0.0
    %262 = vmatpush1.msra.mxu0 %v235
    %263 = vmatprep.subr.mxu0 0.0
    %264 = vmatpush1.msra.mxu0 %v236
    %265 = vmatprep.subr.mxu0 0.0
    %266 = vmatpush1.msra.mxu0 %v237
    %267 = vmatprep.subr.mxu0 0.0
    %268 = vmatpush1.msra.mxu0 %v238
    %269 = vmatprep.subr.mxu0 0.0
    %270 = vmatpush1.msra.mxu0 %v239
    %271 = vmatprep.subr.mxu0 0.0
    %272 = vmatpush1.msra.mxu0 %v240
    %273 = vmatprep.subr.mxu0 0.0
    %274 = vmatpush1.msra.mxu0 %v241
    %275 = vmatprep.subr.mxu0 0.0
    %276 = vmatpush1.msra.mxu0 %v242
    %277 = vmatprep.subr.mxu0 0.0
    %278 = vmatpush1.msra.mxu0 %v243
    %279 = vmatprep.subr.mxu0 0.0
    %280 = vmatpush1.msra.mxu0 %v244
    %281 = vmatprep.subr.mxu0 0.0
    %282 = vmatpush1.msra.mxu0 %v245
    %283 = vmatprep.subr.mxu0 0.0
    %284 = vmatpush1.msra.mxu0 %v246
    %285 = vmatprep.subr.mxu0 0.0
    %286 = vmatpush1.msra.mxu0 %v247
    %287 = vmatprep.subr.mxu0 0.0
    %288 = vmatpush1.msra.mxu0 0.0
    %289 = vmatprep.subr.mxu0 0.0
    %290 = vmatpush1.msra.mxu0 0.0
    %291 = vmatprep.subr.mxu0 0.0
    %292 = vmatpush1.msra.mxu0 0.0
    %293 = vmatprep.subr.mxu0 0.0
    %294 = vmatpush1.msra.mxu0 0.0
    %295 = vmatprep.subr.mxu0 0.0
    %296 = vmatpush1.msra.mxu0 0.0
    %297 = vmatprep.subr.mxu0 0.0
    %298 = vmatpush1.msra.mxu0 0.0
    %299 = vmatprep.subr.mxu0 0.0
    %300 = vmatpush1.msra.mxu0 0.0
    %301 = vmatprep.subr.mxu0 0.0
    %302 = vmatpush1.msra.mxu0 0.0
    %303 = vmatprep.subr.mxu0 0.0
    %304 = vmatpush1.msra.mxu0 0.0
    %305 = vmatprep.subr.mxu0 0.0
    %306 = vmatpush1.msra.mxu0 0.0
    %307 = vmatprep.subr.mxu0 0.0
    %308 = vmatpush1.msra.mxu0 0.0
    %309 = vmatprep.subr.mxu0 0.0
    %310 = vmatpush1.msra.mxu0 0.0
    %311 = vmatprep.subr.mxu0 0.0
    %312 = vmatpush1.msra.mxu0 0.0
    %313 = vmatprep.subr.mxu0 0.0
    %314 = vmatpush1.msra.mxu0 0.0
    %315 = vmatprep.subr.mxu0 0.0
    %316 = vmatpush1.msra.mxu0 0.0
    %317 = vmatprep.subr.mxu0 0.0
    %318 = vmatpush1.msra.mxu0 0.0
    %319 = vmatprep.mubr.f32.mxu0 0.0
    %320 = vmatmul.mubr.f32.gmra.mrb[0].mxu0 %v231
    %v321 = vpop.f32.mrb[0].mxu0
    %v322 = vadd.f32 %v253, %v321
    %v323 = vpop.f32.mrb[0].mxu0
    %324 = vdwg.mxu0
    %325 = vst [vmem:[%s7] sm:$0xff] %v322
    // Predicated region
    $region38: #{_lambda_.1} parent=1 // pred_check
      _
    $region39: #{_lambda_.1} parent=1 // pred_check_branch
      %327 = sbr.rel (0) target = $region41
    $region40: #{_lambda_.1} parent=1 // pred_region
      _
    $region41: #{_lambda_.1} parent=1 // pred_fallthru
      _
    // Predicated region
    $region42: #{_lambda_.1} parent=1 // pred_check
      _
    $region43: #{_lambda_.1} parent=1 // pred_check_branch
      %329 = sbr.rel (0) target = $region45
    $region44: #{_lambda_.1} parent=1 // pred_region
      _
    $region45: #{_lambda_.1} parent=1 // pred_fallthru
      _
    %330 = vsyncpa [#allocation3], 1
    %331 = vsyncpa [#allocation5], 1

</llo_original>
